<compile_context>
chip_gen: v7x
topology: tpu7x:2x2x1
jax: 0.10.0
libtpu: 0.0.40
codegen_flags: <defaults>
</compile_context>

<pallas_src>
import functools

import jax
import jax.numpy as jnp
import numpy as np
from jax.experimental import pallas as pl
from jax.experimental.pallas import tpu as pltpu


# ----------------------------- kernel ---------------------------------------
def decoder_kernel(x_ref, w0_ref, b0_ref, t3_ref, b3_ref, t2_ref, b2_ref,
                   t1_ref, b1_ref, out_ref):
    f32 = jnp.float32
    # fc + relu                                  (bt, L) @ (L, 16*nx)
    h = jnp.dot(x_ref[...], w0_ref[...], preferred_element_type=f32) + b0_ref[...]
    h = jnp.maximum(h, 0.0)
    # convT3 16->8 as one dense matmul on the CHW-flattened activation
    z = jnp.dot(h, t3_ref[...], preferred_element_type=f32) + b3_ref[...]
    z = jnp.maximum(z, 0.0)
    # convT2 8->4
    z = jnp.dot(z, t2_ref[...], preferred_element_type=f32) + b2_ref[...]
    z = jnp.maximum(z, 0.0)
    # convT1 4->1  -> CHW-flat (bt, 7*nc) output block
    z = jnp.dot(z, t1_ref[...], preferred_element_type=f32) + b1_ref[...]
    out_ref[...] = jnp.maximum(z, 0.0)


# ----------------------------- wrapper ---------------------------------------
def _convt_toeplitz(w, h_in, w_in):
    """Dense (Cin*H_in*W_in, Cout*H_out*W_out) matrix T such that
    flat_out = flat_in @ T implements ConvTranspose2d(weight=w, stride=1)
    on CHW-flattened activations (PyTorch .view ordering).
    Index construction is static numpy; only a gather+scatter of `w` is traced."""
    cin, cout, kh, kw = w.shape
    h_out, w_out = h_in + kh - 1, w_in + kw - 1
    ci, ih, iw, co, a, b = np.meshgrid(
        np.arange(cin), np.arange(h_in), np.arange(w_in),
        np.arange(cout), np.arange(kh), np.arange(kw), indexing="ij")
    fin = ((ci * h_in + ih) * w_in + iw).ravel()
    fout = ((co * h_out + (ih + a)) * w_out + (iw + b)).ravel()
    vals = w[ci.ravel(), co.ravel(), a.ravel(), b.ravel()]
    t = jnp.zeros((cin * h_in * w_in, cout * h_out * w_out), w.dtype)
    return t.at[fin, fout].set(vals)


def decoder_forward(x, params, *, nc, nx, batch_tile=None):
    B, L = x.shape
    f32 = jnp.float32
    bt = B if batch_tile is None else batch_tile
    assert B % bt == 0, "batch_tile must divide batch (use a multiple of 8 or B)"

    # Static spatial geometry of the three stride-1 3x3 transposed convs.
    h1, w1s = 1, nx
    h2, w2s = 3, nx + 2
    h3, w3s = 5, nx + 4
    h4, w4s = 7, nx + 6
    assert w4s == nc

    # fc (fc output is already the CHW-flat conv3 input; no reordering needed).
    w0 = params["fc_w"].T.astype(f32)                 # (L, 16*nx)
    b0 = params["fc_b"].reshape(1, -1).astype(f32)    # (1, 16*nx)

    # Transposed convs as dense Toeplitz matmuls + CHW-repeated biases.
    t3 = _convt_toeplitz(params["w3"].astype(f32), h1, w1s)   # (16*nx, 8*3*(nx+2))
    t2 = _convt_toeplitz(params["w2"].astype(f32), h2, w2s)   # (.., 4*5*(nx+4))
    t1 = _convt_toeplitz(params["w1"].astype(f32), h3, w3s)   # (.., 1*7*nc)
    b3 = jnp.repeat(params["b3"].astype(f32), h2 * w2s).reshape(1, -1)
    b2 = jnp.repeat(params["b2"].astype(f32), h3 * w3s).reshape(1, -1)
    b1 = jnp.repeat(params["b1"].astype(f32), h4 * w4s).reshape(1, -1)

    def full(a):  # whole-array block, resident in VMEM across the batch grid
        return pl.BlockSpec(a.shape, lambda i: (0,) * a.ndim)

    out_flat = pl.pallas_call(
        decoder_kernel,
        out_shape=jax.ShapeDtypeStruct((B, h4 * w4s), f32),
        grid=(B // bt,),
        in_specs=[pl.BlockSpec((bt, L), lambda i: (i, 0)),
                  full(w0), full(b0),
                  full(t3), full(b3),
                  full(t2), full(b2),
                  full(t1), full(b1)],
        out_specs=pl.BlockSpec((bt, h4 * w4s), lambda i: (i, 0)),
        compiler_params=pltpu.CompilerParams(
            dimension_semantics=("parallel",)),   # shards batch tiles across TCs
    )(x.astype(f32), w0, b0, t3, b3, t2, b2, t1, b1)

    # CHW-flat (C_out == 1) -> PyTorch NCHW (B, 1, 7, nc): pure reshape, no transpose.
    return out_flat.reshape(B, 1, h4, nc)


# ------------- pure-numpy reference (mirrors the PyTorch semantics) ----------
def reference(x, params):
    x = np.asarray(x, np.float32)
    fc_w = np.asarray(params["fc_w"]); fc_b = np.asarray(params["fc_b"])
    B = x.shape[0]
    nx = fc_w.shape[0] // 16
    h = np.maximum(x @ fc_w.T + fc_b, 0.0).reshape(B, 16, 1, nx)

    def convt(a, w, b):  # NCHW, w: (Cin, Cout, 3, 3), stride 1
        Bx, Cin, H, W = a.shape
        Cout = w.shape[1]
        y = np.zeros((Bx, Cout, H + 2, W + 2), np.float32)
        for kh in range(3):
            for kw in range(3):
                contrib = np.einsum("bchw,co->bohw", a, w[:, :, kh, kw])
                y[:, :, kh:kh + H, kw:kw + W] += contrib
        return np.maximum(y + b[None, :, None, None], 0.0)

    h = convt(h, np.asarray(params["w3"]), np.asarray(params["b3"]))
    h = convt(h, np.asarray(params["w2"]), np.asarray(params["b2"]))
    h = convt(h, np.asarray(params["w1"]), np.asarray(params["b1"]))
    return h


if __name__ == "__main__":
    embed_dim = 16          # nc
    latent_dim = 8
    batch = 2
    nc = embed_dim
    nx = nc - 3 - 3 - 3 + 3  # = nc - 6

    key = jax.random.PRNGKey(0)
    ks = jax.random.split(key, 9)
    f32 = jnp.float32
    params = {
        "fc_w": jax.random.normal(ks[0], (16 * nx, latent_dim), f32) * 0.1,
        "fc_b": jax.random.normal(ks[1], (16 * nx,), f32) * 0.1,
        "w3": jax.random.normal(ks[2], (16, 8, 3, 3), f32) * 0.1,
        "b3": jax.random.normal(ks[3], (8,), f32) * 0.1,
        "w2": jax.random.normal(ks[4], (8, 4, 3, 3), f32) * 0.1,
        "b2": jax.random.normal(ks[5], (4,), f32) * 0.1,
        "w1": jax.random.normal(ks[6], (4, 1, 3, 3), f32) * 0.1,
        "b1": jax.random.normal(ks[7], (1,), f32) * 0.1,
    }
    x = jax.random.normal(ks[8], (batch, latent_dim), f32)

    fwd = jax.jit(functools.partial(decoder_forward, nc=nc, nx=nx))
    out = fwd(x, params)
    jax.block_until_ready(out)

    ref = reference(x, params)
    assert out.shape == (batch, 1, 7, nc), out.shape
    # Tolerance accounts for default (non-HIGHEST) MXU matmul precision on f32 inputs.
    np.testing.assert_allclose(np.asarray(out), ref, rtol=2e-2, atol=5e-3)
    print("KERNEL_OK")
</pallas_src>

<mosaic_0001>
module attributes {stable_mosaic.version = 11 : i64} {
  func.func @decoder_kernel(%arg0: i32, %arg1: memref<2x8xf32, #tpu.memory_space<vmem>>, %arg2: memref<8x160xf32, #tpu.memory_space<vmem>>, %arg3: memref<1x160xf32, #tpu.memory_space<vmem>>, %arg4: memref<160x288xf32, #tpu.memory_space<vmem>>, %arg5: memref<1x288xf32, #tpu.memory_space<vmem>>, %arg6: memref<288x280xf32, #tpu.memory_space<vmem>>, %arg7: memref<1x280xf32, #tpu.memory_space<vmem>>, %arg8: memref<280x112xf32, #tpu.memory_space<vmem>>, %arg9: memref<1x112xf32, #tpu.memory_space<vmem>>, %arg10: memref<2x112xf32, #tpu.memory_space<vmem>>) attributes {dimension_semantics = [#tpu.dimension_semantics<parallel>], iteration_bounds = array<i64: 1>, scalar_prefetch = 0 : i64, scratch_operands = 0 : i64, tpu.core_type = #tpu.core_type<tc>, window_params = [{transform_indices = @transform_0, window_bounds = array<i64: 2, 8>}, {pipeline_mode = #tpu.pipeline_mode<synchronous>, transform_indices = @transform_1, window_bounds = array<i64: 8, 160>}, {pipeline_mode = #tpu.pipeline_mode<synchronous>, transform_indices = @transform_2, window_bounds = array<i64: 1, 160>}, {pipeline_mode = #tpu.pipeline_mode<synchronous>, transform_indices = @transform_3, window_bounds = array<i64: 160, 288>}, {pipeline_mode = #tpu.pipeline_mode<synchronous>, transform_indices = @transform_4, window_bounds = array<i64: 1, 288>}, {pipeline_mode = #tpu.pipeline_mode<synchronous>, transform_indices = @transform_5, window_bounds = array<i64: 288, 280>}, {pipeline_mode = #tpu.pipeline_mode<synchronous>, transform_indices = @transform_6, window_bounds = array<i64: 1, 280>}, {pipeline_mode = #tpu.pipeline_mode<synchronous>, transform_indices = @transform_7, window_bounds = array<i64: 280, 112>}, {pipeline_mode = #tpu.pipeline_mode<synchronous>, transform_indices = @transform_8, window_bounds = array<i64: 1, 112>}, {transform_indices = @transform_9, window_bounds = array<i64: 2, 112>}]} {
    %c0 = arith.constant 0 : index
    %c0_0 = arith.constant 0 : index
    %0 = vector.load %arg1[%c0, %c0_0] : memref<2x8xf32, #tpu.memory_space<vmem>>, vector<2x8xf32>
    %c0_1 = arith.constant 0 : index
    %c0_2 = arith.constant 0 : index
    %1 = vector.load %arg2[%c0_1, %c0_2] : memref<8x160xf32, #tpu.memory_space<vmem>>, vector<8x160xf32>
    %cst = arith.constant dense<0.000000e+00> : vector<2x160xf32>
    %2 = tpu.matmul %0, %1, %cst {dimension_numbers = #tpu.dot_dimension_numbers<[1], [0], [0], [1], [0, 0, 1, 1], [], []>} : vector<2x8xf32>, vector<8x160xf32>, vector<2x160xf32> -> vector<2x160xf32>
    %c0_3 = arith.constant 0 : index
    %c0_4 = arith.constant 0 : index
    %3 = vector.load %arg3[%c0_3, %c0_4] : memref<1x160xf32, #tpu.memory_space<vmem>>, vector<1x160xf32>
    %4 = vector.broadcast %3 : vector<1x160xf32> to vector<2x160xf32>
    %5 = arith.addf %2, %4 : vector<2x160xf32>
    %cst_5 = arith.constant 0.000000e+00 : f32
    %6 = vector.broadcast %cst_5 : f32 to vector<2x160xf32>
    %7 = arith.maximumf %5, %6 : vector<2x160xf32>
    %c0_6 = arith.constant 0 : index
    %c0_7 = arith.constant 0 : index
    %8 = vector.load %arg4[%c0_6, %c0_7] : memref<160x288xf32, #tpu.memory_space<vmem>>, vector<160x288xf32>
    %cst_8 = arith.constant dense<0.000000e+00> : vector<2x288xf32>
    %9 = tpu.matmul %7, %8, %cst_8 {dimension_numbers = #tpu.dot_dimension_numbers<[1], [0], [0], [1], [0, 0, 1, 1], [], []>} : vector<2x160xf32>, vector<160x288xf32>, vector<2x288xf32> -> vector<2x288xf32>
    %c0_9 = arith.constant 0 : index
    %c0_10 = arith.constant 0 : index
    %10 = vector.load %arg5[%c0_9, %c0_10] : memref<1x288xf32, #tpu.memory_space<vmem>>, vector<1x288xf32>
    %11 = vector.broadcast %10 : vector<1x288xf32> to vector<2x288xf32>
    %12 = arith.addf %9, %11 : vector<2x288xf32>
    %cst_11 = arith.constant 0.000000e+00 : f32
    %13 = vector.broadcast %cst_11 : f32 to vector<2x288xf32>
    %14 = arith.maximumf %12, %13 : vector<2x288xf32>
    %c0_12 = arith.constant 0 : index
    %c0_13 = arith.constant 0 : index
    %15 = vector.load %arg6[%c0_12, %c0_13] : memref<288x280xf32, #tpu.memory_space<vmem>>, vector<288x280xf32>
    %cst_14 = arith.constant dense<0.000000e+00> : vector<2x280xf32>
    %16 = tpu.matmul %14, %15, %cst_14 {dimension_numbers = #tpu.dot_dimension_numbers<[1], [0], [0], [1], [0, 0, 1, 1], [], []>} : vector<2x288xf32>, vector<288x280xf32>, vector<2x280xf32> -> vector<2x280xf32>
    %c0_15 = arith.constant 0 : index
    %c0_16 = arith.constant 0 : index
    %17 = vector.load %arg7[%c0_15, %c0_16] : memref<1x280xf32, #tpu.memory_space<vmem>>, vector<1x280xf32>
    %18 = vector.broadcast %17 : vector<1x280xf32> to vector<2x280xf32>
    %19 = arith.addf %16, %18 : vector<2x280xf32>
    %cst_17 = arith.constant 0.000000e+00 : f32
    %20 = vector.broadcast %cst_17 : f32 to vector<2x280xf32>
    %21 = arith.maximumf %19, %20 : vector<2x280xf32>
    %c0_18 = arith.constant 0 : index
    %c0_19 = arith.constant 0 : index
    %22 = vector.load %arg8[%c0_18, %c0_19] : memref<280x112xf32, #tpu.memory_space<vmem>>, vector<280x112xf32>
    %cst_20 = arith.constant dense<0.000000e+00> : vector<2x112xf32>
    %23 = tpu.matmul %21, %22, %cst_20 {dimension_numbers = #tpu.dot_dimension_numbers<[1], [0], [0], [1], [0, 0, 1, 1], [], []>} : vector<2x280xf32>, vector<280x112xf32>, vector<2x112xf32> -> vector<2x112xf32>
    %c0_21 = arith.constant 0 : index
    %c0_22 = arith.constant 0 : index
    %24 = vector.load %arg9[%c0_21, %c0_22] : memref<1x112xf32, #tpu.memory_space<vmem>>, vector<1x112xf32>
    %25 = vector.broadcast %24 : vector<1x112xf32> to vector<2x112xf32>
    %26 = arith.addf %23, %25 : vector<2x112xf32>
    %cst_23 = arith.constant 0.000000e+00 : f32
    %27 = vector.broadcast %cst_23 : f32 to vector<2x112xf32>
    %28 = arith.maximumf %26, %27 : vector<2x112xf32>
    %c0_24 = arith.constant 0 : index
    %c0_25 = arith.constant 0 : index
    %29 = vector.load %arg10[%c0_24, %c0_25] : memref<2x112xf32, #tpu.memory_space<vmem>>, vector<2x112xf32>
    tpu.vector_store %arg10[%c0_24, %c0_25], %28 {strides = array<i32>} : memref<2x112xf32, #tpu.memory_space<vmem>>, vector<2x112xf32>,
    return
  }
  func.func @transform_0(%arg0: i32) -> (i32, i32) {
    %c0_i32 = arith.constant 0 : i32
    %c0_i32_0 = arith.constant 0 : i32
    return %arg0, %c0_i32 : i32, i32
  }
  func.func @transform_1(%arg0: i32) -> (i32, i32) {
    %c0_i32 = arith.constant 0 : i32
    %c0_i32_0 = arith.constant 0 : i32
    %c0_i32_1 = arith.constant 0 : i32
    return %c0_i32, %c0_i32_0 : i32, i32
  }
  func.func @transform_2(%arg0: i32) -> (i32, i32) {
    %c0_i32 = arith.constant 0 : i32
    %c0_i32_0 = arith.constant 0 : i32
    %c0_i32_1 = arith.constant 0 : i32
    return %c0_i32, %c0_i32_0 : i32, i32
  }
  func.func @transform_3(%arg0: i32) -> (i32, i32) {
    %c0_i32 = arith.constant 0 : i32
    %c0_i32_0 = arith.constant 0 : i32
    %c0_i32_1 = arith.constant 0 : i32
    return %c0_i32, %c0_i32_0 : i32, i32
  }
  func.func @transform_4(%arg0: i32) -> (i32, i32) {
    %c0_i32 = arith.constant 0 : i32
    %c0_i32_0 = arith.constant 0 : i32
    %c0_i32_1 = arith.constant 0 : i32
    return %c0_i32, %c0_i32_0 : i32, i32
  }
  func.func @transform_5(%arg0: i32) -> (i32, i32) {
    %c0_i32 = arith.constant 0 : i32
    %c0_i32_0 = arith.constant 0 : i32
    %c0_i32_1 = arith.constant 0 : i32
    return %c0_i32, %c0_i32_0 : i32, i32
  }
  func.func @transform_6(%arg0: i32) -> (i32, i32) {
    %c0_i32 = arith.constant 0 : i32
    %c0_i32_0 = arith.constant 0 : i32
    %c0_i32_1 = arith.constant 0 : i32
    return %c0_i32, %c0_i32_0 : i32, i32
  }
  func.func @transform_7(%arg0: i32) -> (i32, i32) {
    %c0_i32 = arith.constant 0 : i32
    %c0_i32_0 = arith.constant 0 : i32
    %c0_i32_1 = arith.constant 0 : i32
    return %c0_i32, %c0_i32_0 : i32, i32
  }
  func.func @transform_8(%arg0: i32) -> (i32, i32) {
    %c0_i32 = arith.constant 0 : i32
    %c0_i32_0 = arith.constant 0 : i32
    %c0_i32_1 = arith.constant 0 : i32
    return %c0_i32, %c0_i32_0 : i32, i32
  }
  func.func @transform_9(%arg0: i32) -> (i32, i32) {
    %c0_i32 = arith.constant 0 : i32
    %c0_i32_0 = arith.constant 0 : i32
    return %arg0, %c0_i32 : i32, i32
  }
}

</mosaic_0001>

<llo_original>
// kernel: decoder_forward.1
$region0: #{decoder_forward.1}
  #allocation0 [shape = 'u32[]', space=smem, size = 0x4, offset = 0x4, fixed_abs, tag = 'smem constant byte address 0x4 - core index']
  #allocation1 [shape = 'u32[144,128]{1,0:T(1,128)}', space=vmem, size = 0x12000, scoped, tag = 'internal scratch']
  %s0 = inlined_call_operand.vmem [shape: f32[2,8], index: 0, kind: input, shape index: {}]
  %s1 = inlined_call_operand.vmem [shape: f32[8,160], index: 1, kind: input, shape index: {}]
  %s2 = inlined_call_operand.vmem [shape: f32[1,160], index: 2, kind: input, shape index: {}]
  %s3 = inlined_call_operand.vmem [shape: f32[160,288], index: 3, kind: input, shape index: {}]
  %s4 = inlined_call_operand.vmem [shape: f32[1,288], index: 4, kind: input, shape index: {}]
  %s5 = inlined_call_operand.vmem [shape: f32[288,280], index: 5, kind: input, shape index: {}]
  %s6 = inlined_call_operand.vmem [shape: f32[1,280], index: 6, kind: input, shape index: {}]
  %s7 = inlined_call_operand.vmem [shape: f32[280,112], index: 7, kind: input, shape index: {}]
  %s8 = inlined_call_operand.vmem [shape: f32[1,112], index: 8, kind: input, shape index: {}]
  %s9 = inlined_call_operand.vmem [shape: f32[2,112], index: 9, kind: output, shape index: {}]
  %s10 = sld [smem:[#allocation0]]
  $region46: #{decoder_forward.1} parent=0
    _
  %s12 = ssub.s32 1, %s10
  %s13 = scalar_select 0, %s12, %s10
  // Predicated region
  $region2: #{decoder_forward.1} parent=0 // pred_check
    _
  $region3: #{decoder_forward.1} parent=0 // pred_check_branch
    %15 = sbr.rel (0) target = $region5
  $region4: #{decoder_forward.1} parent=0 // pred_region
    _
  $region5: #{decoder_forward.1} parent=0 // pred_fallthru
    _
  // Predicated region
  $region6: #{decoder_forward.1} parent=0 // pred_check
    _
  $region7: #{decoder_forward.1} parent=0 // pred_check_branch
    %17 = sbr.rel (0) target = $region9
  $region8: #{decoder_forward.1} parent=0 // pred_region
    _
  $region9: #{decoder_forward.1} parent=0 // pred_fallthru
    _
  // Predicated region
  $region10: #{decoder_forward.1} parent=0 // pred_check
    _
  $region11: #{decoder_forward.1} parent=0 // pred_check_branch
    %19 = sbr.rel (0) target = $region13
  $region12: #{decoder_forward.1} parent=0 // pred_region
    _
  $region13: #{decoder_forward.1} parent=0 // pred_fallthru
    _
  // Predicated region
  $region14: #{decoder_forward.1} parent=0 // pred_check
    _
  $region15: #{decoder_forward.1} parent=0 // pred_check_branch
    %21 = sbr.rel (0) target = $region17
  $region16: #{decoder_forward.1} parent=0 // pred_region
    _
  $region17: #{decoder_forward.1} parent=0 // pred_fallthru
    _
  // Predicated region
  $region18: #{decoder_forward.1} parent=0 // pred_check
    _
  $region19: #{decoder_forward.1} parent=0 // pred_check_branch
    %23 = sbr.rel (0) target = $region21
  $region20: #{decoder_forward.1} parent=0 // pred_region
    _
  $region21: #{decoder_forward.1} parent=0 // pred_fallthru
    _
  // Predicated region
  $region22: #{decoder_forward.1} parent=0 // pred_check
    _
  $region23: #{decoder_forward.1} parent=0 // pred_check_branch
    %25 = sbr.rel (0) target = $region25
  $region24: #{decoder_forward.1} parent=0 // pred_region
    _
  $region25: #{decoder_forward.1} parent=0 // pred_fallthru
    _
  // Predicated region
  $region26: #{decoder_forward.1} parent=0 // pred_check
    _
  $region27: #{decoder_forward.1} parent=0 // pred_check_branch
    %27 = sbr.rel (0) target = $region29
  $region28: #{decoder_forward.1} parent=0 // pred_region
    _
  $region29: #{decoder_forward.1} parent=0 // pred_fallthru
    _
  // Predicated region
  $region30: #{decoder_forward.1} parent=0 // pred_check
    _
  $region31: #{decoder_forward.1} parent=0 // pred_check_branch
    %29 = sbr.rel (0) target = $region33
  $region32: #{decoder_forward.1} parent=0 // pred_region
    _
  $region33: #{decoder_forward.1} parent=0 // pred_fallthru
    _
  // Predicated region
  $region34: #{decoder_forward.1} parent=0 // pred_check
    _
  $region35: #{decoder_forward.1} parent=0 // pred_check_branch
    %31 = sbr.rel (0) target = $region37
  $region36: #{decoder_forward.1} parent=0 // pred_region
    _
  $region37: #{decoder_forward.1} parent=0 // pred_fallthru
    _
  %v32 = vld [vmem:[%s0] sm:$0x3]
  %v33 = vld [vmem:[%s1] sm:$0xff]
  %v34 = vld [vmem:[%s1 + $0x8] sm:$0xff]
  %v35 = vld [vmem:[%s2] sm:$0x3]
  %v37 = vlaneseq
  %v38 = vshrl.u32 %v37, 7
  %v39 = vsub.s32 0, %v38
  %v40 = vrot.slane %v35, %v39
  %v41 = vlaneseq
  %v42 = vshrl.u32 %v41, 7
  %v43 = vsub.s32 1, %v42
  %v44 = vrot.slane %v35, %v43
  %vm47 = vcmask 64512
  %v49 = vsel %vm47, %v32, 0
  %51 = vmatprep.subr.mxu0 %v34
  %52 = vmatpush1.msra.mxu0 %v33
  %53 = vmatprep.subr.mxu0 0.0
  %54 = vmatpush1.msra.mxu0 0.0
  %55 = vmatprep.subr.mxu0 0.0
  %56 = vmatpush1.msra.mxu0 0.0
  %57 = vmatprep.subr.mxu0 0.0
  %58 = vmatpush1.msra.mxu0 0.0
  %59 = vmatprep.subr.mxu0 0.0
  %60 = vmatpush1.msra.mxu0 0.0
  %61 = vmatprep.subr.mxu0 0.0
  %62 = vmatpush1.msra.mxu0 0.0
  %63 = vmatprep.subr.mxu0 0.0
  %64 = vmatpush1.msra.mxu0 0.0
  %65 = vmatprep.subr.mxu0 0.0
  %66 = vmatpush1.msra.mxu0 0.0
  %67 = vmatprep.subr.mxu0 0.0
  %68 = vmatpush1.msra.mxu0 0.0
  %69 = vmatprep.subr.mxu0 0.0
  %70 = vmatpush1.msra.mxu0 0.0
  %71 = vmatprep.subr.mxu0 0.0
  %72 = vmatpush1.msra.mxu0 0.0
  %73 = vmatprep.subr.mxu0 0.0
  %74 = vmatpush1.msra.mxu0 0.0
  %75 = vmatprep.subr.mxu0 0.0
  %76 = vmatpush1.msra.mxu0 0.0
  %77 = vmatprep.subr.mxu0 0.0
  %78 = vmatpush1.msra.mxu0 0.0
  %79 = vmatprep.subr.mxu0 0.0
  %80 = vmatpush1.msra.mxu0 0.0
  %81 = vmatprep.subr.mxu0 0.0
  %82 = vmatpush1.msra.mxu0 0.0
  %83 = vmatprep.subr.mxu0 0.0
  %84 = vmatpush1.msra.mxu0 0.0
  %85 = vmatprep.subr.mxu0 0.0
  %86 = vmatpush1.msra.mxu0 0.0
  %87 = vmatprep.subr.mxu0 0.0
  %88 = vmatpush1.msra.mxu0 0.0
  %89 = vmatprep.subr.mxu0 0.0
  %90 = vmatpush1.msra.mxu0 0.0
  %91 = vmatprep.subr.mxu0 0.0
  %92 = vmatpush1.msra.mxu0 0.0
  %93 = vmatprep.subr.mxu0 0.0
  %94 = vmatpush1.msra.mxu0 0.0
  %95 = vmatprep.subr.mxu0 0.0
  %96 = vmatpush1.msra.mxu0 0.0
  %97 = vmatprep.subr.mxu0 0.0
  %98 = vmatpush1.msra.mxu0 0.0
  %99 = vmatprep.subr.mxu0 0.0
  %100 = vmatpush1.msra.mxu0 0.0
  %101 = vmatprep.subr.mxu0 0.0
  %102 = vmatpush1.msra.mxu0 0.0
  %103 = vmatprep.subr.mxu0 0.0
  %104 = vmatpush1.msra.mxu0 0.0
  %105 = vmatprep.subr.mxu0 0.0
  %106 = vmatpush1.msra.mxu0 0.0
  %107 = vmatprep.subr.mxu0 0.0
  %108 = vmatpush1.msra.mxu0 0.0
  %109 = vmatprep.subr.mxu0 0.0
  %110 = vmatpush1.msra.mxu0 0.0
  %111 = vmatprep.subr.mxu0 0.0
  %112 = vmatpush1.msra.mxu0 0.0
  %113 = vmatprep.subr.mxu0 0.0
  %114 = vmatpush1.msra.mxu0 0.0
  %115 = vmatprep.mubr.f32.mxu0 0.0
  %116 = vmatmul.mubr.f32.gmra.mrb[0].mxu0 %v49
  %v117 = vpop.f32.mrb[0].mxu0
  %v118 = vadd.f32 %v40, %v117
  %v119 = vpop.f32.mrb[0].mxu0
  %v120 = vadd.f32 %v44, %v119
  %121 = vdwg.mxu0
  %v122 = vmax.f32 %v118, 0.0
  %v123 = vmax.f32 %v120, 0.0
  %v124 = vld [vmem:[%s3] sm:$0xff]
  %v125 = vld [vmem:[%s3 + $0x8] sm:$0xff]
  %v126 = vld [vmem:[%s3 + $0x10] sm:$0xff]
  %v127 = vld [vmem:[%s3 + $0x18] sm:$0xff]
  %v128 = vld [vmem:[%s3 + $0x20] sm:$0xff]
  %v129 = vld [vmem:[%s3 + $0x28] sm:$0xff]
  %v130 = vld [vmem:[%s3 + $0x30] sm:$0xff]
  %v131 = vld [vmem:[%s3 + $0x38] sm:$0xff]
  %v132 = vld [vmem:[%s3 + $0x40] sm:$0xff]
  %v133 = vld [vmem:[%s3 + $0x48] sm:$0xff]
  %v134 = vld [vmem:[%s3 + $0x50] sm:$0xff]
  %v135 = vld [vmem:[%s3 + $0x58] sm:$0xff]
  %v136 = vld [vmem:[%s3 + $0x60] sm:$0xff]
  %v137 = vld [vmem:[%s3 + $0x68] sm:$0xff]
  %v138 = vld [vmem:[%s3 + $0x70] sm:$0xff]
  %v139 = vld [vmem:[%s3 + $0x78] sm:$0xff]
  %v140 = vld [vmem:[%s3 + $0x80] sm:$0xff]
  %v141 = vld [vmem:[%s3 + $0x88] sm:$0xff]
  %v142 = vld [vmem:[%s3 + $0x90] sm:$0xff]
  %v143 = vld [vmem:[%s3 + $0x98] sm:$0xff]
  %v144 = vld [vmem:[%s3 + $0xa0] sm:$0xff]
  %v145 = vld [vmem:[%s3 + $0xa8] sm:$0xff]
  %v146 = vld [vmem:[%s3 + $0xb0] sm:$0xff]
  %v147 = vld [vmem:[%s3 + $0xb8] sm:$0xff]
  %v148 = vld [vmem:[%s3 + $0xc0] sm:$0xff]
  %v149 = vld [vmem:[%s3 + $0xc8] sm:$0xff]
  %v150 = vld [vmem:[%s3 + $0xd0] sm:$0xff]
  %v151 = vld [vmem:[%s3 + $0xd8] sm:$0xff]
  %v152 = vld [vmem:[%s3 + $0xe0] sm:$0xff]
  %v153 = vld [vmem:[%s3 + $0xe8] sm:$0xff]
  %v154 = vld [vmem:[%s3 + $0xf0] sm:$0xff]
  %v155 = vld [vmem:[%s3 + $0xf8] sm:$0xff]
  %v156 = vld [vmem:[%s3 + $0x100] sm:$0xff]
  %v157 = vld [vmem:[%s3 + $0x108] sm:$0xff]
  %v158 = vld [vmem:[%s3 + $0x110] sm:$0xff]
  %v159 = vld [vmem:[%s3 + $0x118] sm:$0xff]
  %v160 = vld [vmem:[%s3 + $0x120] sm:$0xff]
  %v161 = vld [vmem:[%s3 + $0x128] sm:$0xff]
  %v162 = vld [vmem:[%s3 + $0x130] sm:$0xff]
  %v163 = vld [vmem:[%s3 + $0x138] sm:$0xff]
  %v164 = vld [vmem:[%s3 + $0x140] sm:$0xff]
  %v165 = vld [vmem:[%s3 + $0x148] sm:$0xff]
  %v166 = vld [vmem:[%s3 + $0x150] sm:$0xff]
  %v167 = vld [vmem:[%s3 + $0x158] sm:$0xff]
  %v168 = vld [vmem:[%s3 + $0x160] sm:$0xff]
  %v169 = vld [vmem:[%s3 + $0x168] sm:$0xff]
  %v170 = vld [vmem:[%s3 + $0x170] sm:$0xff]
  %v171 = vld [vmem:[%s3 + $0x178] sm:$0xff]
  %v172 = vld [vmem:[%s3 + $0x180] sm:$0xff]
  %v173 = vld [vmem:[%s3 + $0x188] sm:$0xff]
  %v174 = vld [vmem:[%s3 + $0x190] sm:$0xff]
  %v175 = vld [vmem:[%s3 + $0x198] sm:$0xff]
  %v176 = vld [vmem:[%s3 + $0x1a0] sm:$0xff]
  %v177 = vld [vmem:[%s3 + $0x1a8] sm:$0xff]
  %v178 = vld [vmem:[%s3 + $0x1b0] sm:$0xff]
  %v179 = vld [vmem:[%s3 + $0x1b8] sm:$0xff]
  %v180 = vld [vmem:[%s3 + $0x1c0] sm:$0xff]
  %v181 = vld [vmem:[%s3 + $0x1c8] sm:$0xff]
  %v182 = vld [vmem:[%s3 + $0x1d0] sm:$0xff]
  %v183 = vld [vmem:[%s3 + $0x1d8] sm:$0xff]
  %v184 = vld [vmem:[%s4] sm:$0x7]
  %v186 = vlaneseq
  %v187 = vshrl.u32 %v186, 7
  %v188 = vsub.s32 0, %v187
  %v189 = vrot.slane %v184, %v188
  %v190 = vlaneseq
  %v191 = vshrl.u32 %v190, 7
  %v192 = vsub.s32 1, %v191
  %v193 = vrot.slane %v184, %v192
  %v194 = vlaneseq
  %v195 = vshrl.u32 %v194, 7
  %v196 = vsub.s32 2, %v195
  %v197 = vrot.slane %v184, %v196
  %vm201 = vcmask 261120
  %v203 = vsel %vm201, %v123, 0
  %205 = vmatprep.subr.mxu0 %v125
  %206 = vmatpush1.msra.mxu0 %v124
  %207 = vmatprep.subr.mxu0 %v128
  %208 = vmatpush1.msra.mxu0 %v127
  %209 = vmatprep.subr.mxu0 %v131
  %210 = vmatpush1.msra.mxu0 %v130
  %211 = vmatprep.subr.mxu0 %v134
  %212 = vmatpush1.msra.mxu0 %v133
  %213 = vmatprep.subr.mxu0 %v137
  %214 = vmatpush1.msra.mxu0 %v136
  %215 = vmatprep.subr.mxu0 %v140
  %216 = vmatpush1.msra.mxu0 %v139
  %217 = vmatprep.subr.mxu0 %v143
  %218 = vmatpush1.msra.mxu0 %v142
  %219 = vmatprep.subr.mxu0 %v146
  %220 = vmatpush1.msra.mxu0 %v145
  %221 = vmatprep.subr.mxu0 %v149
  %222 = vmatpush1.msra.mxu0 %v148
  %223 = vmatprep.subr.mxu0 %v152
  %224 = vmatpush1.msra.mxu0 %v151
  %225 = vmatprep.subr.mxu0 %v155
  %226 = vmatpush1.msra.mxu0 %v154
  %227 = vmatprep.subr.mxu0 %v158
  %228 = vmatpush1.msra.mxu0 %v157
  %229 = vmatprep.subr.mxu0 %v161
  %230 = vmatpush1.msra.mxu0 %v160
  %231 = vmatprep.subr.mxu0 %v164
  %232 = vmatpush1.msra.mxu0 %v163
  %233 = vmatprep.subr.mxu0 %v167
  %234 = vmatpush1.msra.mxu0 %v166
  %235 = vmatprep.subr.mxu0 %v170
  %236 = vmatpush1.msra.mxu0 %v169
  %237 = vmatprep.subr.mxu0 %v173
  %238 = vmatpush1.msra.mxu0 %v172
  %239 = vmatprep.subr.mxu0 %v176
  %240 = vmatpush1.msra.mxu0 %v175
  %241 = vmatprep.subr.mxu0 %v179
  %242 = vmatpush1.msra.mxu0 %v178
  %243 = vmatprep.subr.mxu0 %v182
  %244 = vmatpush1.msra.mxu0 %v181
  %245 = vmatprep.subr.mxu0 0.0
  %246 = vmatpush1.msra.mxu0 0.0
  %247 = vmatprep.subr.mxu0 0.0
  %248 = vmatpush1.msra.mxu0 0.0
  %249 = vmatprep.subr.mxu0 0.0
  %250 = vmatpush1.msra.mxu0 0.0
  %251 = vmatprep.subr.mxu0 0.0
  %252 = vmatpush1.msra.mxu0 0.0
  %253 = vmatprep.subr.mxu0 0.0
  %254 = vmatpush1.msra.mxu0 0.0
  %255 = vmatprep.subr.mxu0 0.0
  %256 = vmatpush1.msra.mxu0 0.0
  %257 = vmatprep.subr.mxu0 0.0
  %258 = vmatpush1.msra.mxu0 0.0
  %259 = vmatprep.subr.mxu0 0.0
  %260 = vmatpush1.msra.mxu0 0.0
  %261 = vmatprep.subr.mxu0 0.0
  %262 = vmatpush1.msra.mxu0 0.0
  %263 = vmatprep.subr.mxu0 0.0
  %264 = vmatpush1.msra.mxu0 0.0
  %265 = vmatprep.subr.mxu0 0.0
  %266 = vmatpush1.msra.mxu0 0.0
  %267 = vmatprep.subr.mxu0 0.0
  %268 = vmatpush1.msra.mxu0 0.0
  %269 = vmatprep.mubr.f32.mxu0 %v203
  %270 = vmatmul.mubr.f32.gmra.mrb[0].mxu0 %v122
  %v271 = vpop.f32.mrb[0].mxu0
  %v272 = vadd.f32 %v189, %v271
  %v273 = vpop.f32.mrb[0].mxu0
  %v274 = vadd.f32 %v193, %v273
  %275 = vdwg.mxu0
  %276 = vmatprep.subr.mxu0 0.0
  %277 = vmatpush1.msra.mxu0 %v126
  %278 = vmatprep.subr.mxu0 0.0
  %279 = vmatpush1.msra.mxu0 %v129
  %280 = vmatprep.subr.mxu0 0.0
  %281 = vmatpush1.msra.mxu0 %v132
  %282 = vmatprep.subr.mxu0 0.0
  %283 = vmatpush1.msra.mxu0 %v135
  %284 = vmatprep.subr.mxu0 0.0
  %285 = vmatpush1.msra.mxu0 %v138
  %286 = vmatprep.subr.mxu0 0.0
  %287 = vmatpush1.msra.mxu0 %v141
  %288 = vmatprep.subr.mxu0 0.0
  %289 = vmatpush1.msra.mxu0 %v144
  %290 = vmatprep.subr.mxu0 0.0
  %291 = vmatpush1.msra.mxu0 %v147
  %292 = vmatprep.subr.mxu0 0.0
  %293 = vmatpush1.msra.mxu0 %v150
  %294 = vmatprep.subr.mxu0 0.0
  %295 = vmatpush1.msra.mxu0 %v153
  %296 = vmatprep.subr.mxu0 0.0
  %297 = vmatpush1.msra.mxu0 %v156
  %298 = vmatprep.subr.mxu0 0.0
  %299 = vmatpush1.msra.mxu0 %v159
  %300 = vmatprep.subr.mxu0 0.0
  %301 = vmatpush1.msra.mxu0 %v162
  %302 = vmatprep.subr.mxu0 0.0
  %303 = vmatpush1.msra.mxu0 %v165
  %304 = vmatprep.subr.mxu0 0.0
  %305 = vmatpush1.msra.mxu0 %v168
  %306 = vmatprep.subr.mxu0 0.0
  %307 = vmatpush1.msra.mxu0 %v171
  %308 = vmatprep.subr.mxu0 0.0
  %309 = vmatpush1.msra.mxu0 %v174
  %310 = vmatprep.subr.mxu0 0.0
  %311 = vmatpush1.msra.mxu0 %v177
  %312 = vmatprep.subr.mxu0 0.0
  %313 = vmatpush1.msra.mxu0 %v180
  %314 = vmatprep.subr.mxu0 0.0
  %315 = vmatpush1.msra.mxu0 %v183
  %316 = vmatprep.subr.mxu0 0.0
  %317 = vmatpush1.msra.mxu0 0.0
  %318 = vmatprep.subr.mxu0 0.0
  %319 = vmatpush1.msra.mxu0 0.0
  %320 = vmatprep.subr.mxu0 0.0
  %321 = vmatpush1.msra.mxu0 0.0
  %322 = vmatprep.subr.mxu0 0.0
  %323 = vmatpush1.msra.mxu0 0.0
  %324 = vmatprep.subr.mxu0 0.0
  %325 = vmatpush1.msra.mxu0 0.0
  %326 = vmatprep.subr.mxu0 0.0
  %327 = vmatpush1.msra.mxu0 0.0
  %328 = vmatprep.subr.mxu0 0.0
  %329 = vmatpush1.msra.mxu0 0.0
  %330 = vmatprep.subr.mxu0 0.0
  %331 = vmatpush1.msra.mxu0 0.0
  %332 = vmatprep.subr.mxu0 0.0
  %333 = vmatpush1.msra.mxu0 0.0
  %334 = vmatprep.subr.mxu0 0.0
  %335 = vmatpush1.msra.mxu0 0.0
  %336 = vmatprep.subr.mxu0 0.0
  %337 = vmatpush1.msra.mxu0 0.0
  %338 = vmatprep.subr.mxu0 0.0
  %339 = vmatpush1.msra.mxu0 0.0
  %340 = vmatprep.mubr.f32.mxu0 %v203
  %341 = vmatmul.mubr.f32.gmra.mrb[0].mxu0 %v122
  %v342 = vpop.f32.mrb[0].mxu0
  %v343 = vadd.f32 %v197, %v342
  %v344 = vpop.f32.mrb[0].mxu0
  %345 = vdwg.mxu0
  %v346 = vmax.f32 %v272, 0.0
  %v347 = vmax.f32 %v274, 0.0
  %v348 = vmax.f32 %v343, 0.0
  %v349 = vld [vmem:[%s5] sm:$0xff]
  %v350 = vld [vmem:[%s5 + $0x8] sm:$0xff]
  %v351 = vld [vmem:[%s5 + $0x10] sm:$0xff]
  %v352 = vld [vmem:[%s5 + $0x18] sm:$0xff]
  %v353 = vld [vmem:[%s5 + $0x20] sm:$0xff]
  %v354 = vld [vmem:[%s5 + $0x28] sm:$0xff]
  %v355 = vld [vmem:[%s5 + $0x30] sm:$0xff]
  %v356 = vld [vmem:[%s5 + $0x38] sm:$0xff]
  %v357 = vld [vmem:[%s5 + $0x40] sm:$0xff]
  %v358 = vld [vmem:[%s5 + $0x48] sm:$0xff]
  %v359 = vld [vmem:[%s5 + $0x50] sm:$0xff]
  %v360 = vld [vmem:[%s5 + $0x58] sm:$0xff]
  %v361 = vld [vmem:[%s5 + $0x60] sm:$0xff]
  %v362 = vld [vmem:[%s5 + $0x68] sm:$0xff]
  %v363 = vld [vmem:[%s5 + $0x70] sm:$0xff]
  %v364 = vld [vmem:[%s5 + $0x78] sm:$0xff]
  %v365 = vld [vmem:[%s5 + $0x80] sm:$0xff]
  %v366 = vld [vmem:[%s5 + $0x88] sm:$0xff]
  %v367 = vld [vmem:[%s5 + $0x90] sm:$0xff]
  %v368 = vld [vmem:[%s5 + $0x98] sm:$0xff]
  %v369 = vld [vmem:[%s5 + $0xa0] sm:$0xff]
  %v370 = vld [vmem:[%s5 + $0xa8] sm:$0xff]
  %v371 = vld [vmem:[%s5 + $0xb0] sm:$0xff]
  %v372 = vld [vmem:[%s5 + $0xb8] sm:$0xff]
  %v373 = vld [vmem:[%s5 + $0xc0] sm:$0xff]
  %v374 = vld [vmem:[%s5 + $0xc8] sm:$0xff]
  %v375 = vld [vmem:[%s5 + $0xd0] sm:$0xff]
  %v376 = vld [vmem:[%s5 + $0xd8] sm:$0xff]
  %v377 = vld [vmem:[%s5 + $0xe0] sm:$0xff]
  %v378 = vld [vmem:[%s5 + $0xe8] sm:$0xff]
  %v379 = vld [vmem:[%s5 + $0xf0] sm:$0xff]
  %v380 = vld [vmem:[%s5 + $0xf8] sm:$0xff]
  %v381 = vld [vmem:[%s5 + $0x100] sm:$0xff]
  %v382 = vld [vmem:[%s5 + $0x108] sm:$0xff]
  %v383 = vld [vmem:[%s5 + $0x110] sm:$0xff]
  %v384 = vld [vmem:[%s5 + $0x118] sm:$0xff]
  %v385 = vld [vmem:[%s5 + $0x120] sm:$0xff]
  %v386 = vld [vmem:[%s5 + $0x128] sm:$0xff]
  %v387 = vld [vmem:[%s5 + $0x130] sm:$0xff]
  %v388 = vld [vmem:[%s5 + $0x138] sm:$0xff]
  %v389 = vld [vmem:[%s5 + $0x140] sm:$0xff]
  %v390 = vld [vmem:[%s5 + $0x148] sm:$0xff]
  %v391 = vld [vmem:[%s5 + $0x150] sm:$0xff]
  %v392 = vld [vmem:[%s5 + $0x158] sm:$0xff]
  %v393 = vld [vmem:[%s5 + $0x160] sm:$0xff]
  %v394 = vld [vmem:[%s5 + $0x168] sm:$0xff]
  %v395 = vld [vmem:[%s5 + $0x170] sm:$0xff]
  %v396 = vld [vmem:[%s5 + $0x178] sm:$0xff]
  %v397 = vld [vmem:[%s5 + $0x180] sm:$0xff]
  %v398 = vld [vmem:[%s5 + $0x188] sm:$0xff]
  %v399 = vld [vmem:[%s5 + $0x190] sm:$0xff]
  %v400 = vld [vmem:[%s5 + $0x198] sm:$0xff]
  %v401 = vld [vmem:[%s5 + $0x1a0] sm:$0xff]
  %v402 = vld [vmem:[%s5 + $0x1a8] sm:$0xff]
  %v403 = vld [vmem:[%s5 + $0x1b0] sm:$0xff]
  %v404 = vld [vmem:[%s5 + $0x1b8] sm:$0xff]
  %v405 = vld [vmem:[%s5 + $0x1c0] sm:$0xff]
  %v406 = vld [vmem:[%s5 + $0x1c8] sm:$0xff]
  %v407 = vld [vmem:[%s5 + $0x1d0] sm:$0xff]
  %v408 = vld [vmem:[%s5 + $0x1d8] sm:$0xff]
  %v409 = vld [vmem:[%s5 + $0x1e0] sm:$0xff]
  %v410 = vld [vmem:[%s5 + $0x1e8] sm:$0xff]
  %v411 = vld [vmem:[%s5 + $0x1f0] sm:$0xff]
  %v412 = vld [vmem:[%s5 + $0x1f8] sm:$0xff]
  %v413 = vld [vmem:[%s5 + $0x200] sm:$0xff]
  %v414 = vld [vmem:[%s5 + $0x208] sm:$0xff]
  %v415 = vld [vmem:[%s5 + $0x210] sm:$0xff]
  %v416 = vld [vmem:[%s5 + $0x218] sm:$0xff]
  %v417 = vld [vmem:[%s5 + $0x220] sm:$0xff]
  %v418 = vld [vmem:[%s5 + $0x228] sm:$0xff]
  %v419 = vld [vmem:[%s5 + $0x230] sm:$0xff]
  %v420 = vld [vmem:[%s5 + $0x238] sm:$0xff]
  %v421 = vld [vmem:[%s5 + $0x240] sm:$0xff]
  %v422 = vld [vmem:[%s5 + $0x248] sm:$0xff]
  %v423 = vld [vmem:[%s5 + $0x250] sm:$0xff]
  %v424 = vld [vmem:[%s5 + $0x258] sm:$0xff]
  %v425 = vld [vmem:[%s5 + $0x260] sm:$0xff]
  %v426 = vld [vmem:[%s5 + $0x268] sm:$0xff]
  %v427 = vld [vmem:[%s5 + $0x270] sm:$0xff]
  %v428 = vld [vmem:[%s5 + $0x278] sm:$0xff]
  %v429 = vld [vmem:[%s5 + $0x280] sm:$0xff]
  %v430 = vld [vmem:[%s5 + $0x288] sm:$0xff]
  %v431 = vld [vmem:[%s5 + $0x290] sm:$0xff]
  %v432 = vld [vmem:[%s5 + $0x298] sm:$0xff]
  %v433 = vld [vmem:[%s5 + $0x2a0] sm:$0xff]
  %v434 = vld [vmem:[%s5 + $0x2a8] sm:$0xff]
  %v435 = vld [vmem:[%s5 + $0x2b0] sm:$0xff]
  %v436 = vld [vmem:[%s5 + $0x2b8] sm:$0xff]
  %v437 = vld [vmem:[%s5 + $0x2c0] sm:$0xff]
  %v438 = vld [vmem:[%s5 + $0x2c8] sm:$0xff]
  %v439 = vld [vmem:[%s5 + $0x2d0] sm:$0xff]
  %v440 = vld [vmem:[%s5 + $0x2d8] sm:$0xff]
  %v441 = vld [vmem:[%s5 + $0x2e0] sm:$0xff]
  %v442 = vld [vmem:[%s5 + $0x2e8] sm:$0xff]
  %v443 = vld [vmem:[%s5 + $0x2f0] sm:$0xff]
  %v444 = vld [vmem:[%s5 + $0x2f8] sm:$0xff]
  %v445 = vld [vmem:[%s5 + $0x300] sm:$0xff]
  %v446 = vld [vmem:[%s5 + $0x308] sm:$0xff]
  %v447 = vld [vmem:[%s5 + $0x310] sm:$0xff]
  %v448 = vld [vmem:[%s5 + $0x318] sm:$0xff]
  %v449 = vld [vmem:[%s5 + $0x320] sm:$0xff]
  %v450 = vld [vmem:[%s5 + $0x328] sm:$0xff]
  %v451 = vld [vmem:[%s5 + $0x330] sm:$0xff]
  %v452 = vld [vmem:[%s5 + $0x338] sm:$0xff]
  %v453 = vld [vmem:[%s5 + $0x340] sm:$0xff]
  %v454 = vld [vmem:[%s5 + $0x348] sm:$0xff]
  %v455 = vld [vmem:[%s5 + $0x350] sm:$0xff]
  %v456 = vld [vmem:[%s5 + $0x358] sm:$0xff]
  %v457 = vld [vmem:[%s6] sm:$0x7]
  %v459 = vlaneseq
  %v460 = vshrl.u32 %v459, 7
  %v461 = vsub.s32 0, %v460
  %v462 = vrot.slane %v457, %v461
  %v463 = vlaneseq
  %v464 = vshrl.u32 %v463, 7
  %v465 = vsub.s32 1, %v464
  %v466 = vrot.slane %v457, %v465
  %v467 = vlaneseq
  %v468 = vshrl.u32 %v467, 7
  %v469 = vsub.s32 2, %v468
  %v470 = vrot.slane %v457, %v469
  %v475 = vsel %vm201, %v348, 0
  %477 = vmatprep.subr.mxu0 %v350
  %478 = vmatpush1.msra.mxu0 %v349
  %479 = vmatprep.subr.mxu0 %v353
  %480 = vmatpush1.msra.mxu0 %v352
  %481 = vmatprep.subr.mxu0 %v356
  %482 = vmatpush1.msra.mxu0 %v355
  %483 = vmatprep.subr.mxu0 %v359
  %484 = vmatpush1.msra.mxu0 %v358
  %485 = vmatprep.subr.mxu0 %v362
  %486 = vmatpush1.msra.mxu0 %v361
  %487 = vmatprep.subr.mxu0 %v365
  %488 = vmatpush1.msra.mxu0 %v364
  %489 = vmatprep.subr.mxu0 %v368
  %490 = vmatpush1.msra.mxu0 %v367
  %491 = vmatprep.subr.mxu0 %v371
  %492 = vmatpush1.msra.mxu0 %v370
  %493 = vmatprep.subr.mxu0 %v374
  %494 = vmatpush1.msra.mxu0 %v373
  %495 = vmatprep.subr.mxu0 %v377
  %496 = vmatpush1.msra.mxu0 %v376
  %497 = vmatprep.subr.mxu0 %v380
  %498 = vmatpush1.msra.mxu0 %v379
  %499 = vmatprep.subr.mxu0 %v383
  %500 = vmatpush1.msra.mxu0 %v382
  %501 = vmatprep.subr.mxu0 %v386
  %502 = vmatpush1.msra.mxu0 %v385
  %503 = vmatprep.subr.mxu0 %v389
  %504 = vmatpush1.msra.mxu0 %v388
  %505 = vmatprep.subr.mxu0 %v392
  %506 = vmatpush1.msra.mxu0 %v391
  %507 = vmatprep.subr.mxu0 %v395
  %508 = vmatpush1.msra.mxu0 %v394
  %509 = vmatprep.subr.mxu0 %v398
  %510 = vmatpush1.msra.mxu0 %v397
  %511 = vmatprep.subr.mxu0 %v401
  %512 = vmatpush1.msra.mxu0 %v400
  %513 = vmatprep.subr.mxu0 %v404
  %514 = vmatpush1.msra.mxu0 %v403
  %515 = vmatprep.subr.mxu0 %v407
  %516 = vmatpush1.msra.mxu0 %v406
  %517 = vmatprep.subr.mxu0 %v410
  %518 = vmatpush1.msra.mxu0 %v409
  %519 = vmatprep.subr.mxu0 %v413
  %520 = vmatpush1.msra.mxu0 %v412
  %521 = vmatprep.subr.mxu0 %v416
  %522 = vmatpush1.msra.mxu0 %v415
  %523 = vmatprep.subr.mxu0 %v419
  %524 = vmatpush1.msra.mxu0 %v418
  %525 = vmatprep.subr.mxu0 %v422
  %526 = vmatpush1.msra.mxu0 %v421
  %527 = vmatprep.subr.mxu0 %v425
  %528 = vmatpush1.msra.mxu0 %v424
  %529 = vmatprep.subr.mxu0 %v428
  %530 = vmatpush1.msra.mxu0 %v427
  %531 = vmatprep.subr.mxu0 %v431
  %532 = vmatpush1.msra.mxu0 %v430
  %533 = vmatprep.subr.mxu0 %v434
  %534 = vmatpush1.msra.mxu0 %v433
  %535 = vmatprep.subr.mxu0 %v437
  %536 = vmatpush1.msra.mxu0 %v436
  %537 = vmatprep.subr.mxu0 %v440
  %538 = vmatpush1.msra.mxu0 %v439
  %539 = vmatprep.subr.mxu0 %v443
  %540 = vmatpush1.msra.mxu0 %v442
  %541 = vmatprep.mubr.f32.mxu0 %v347
  %542 = vmatmul.mubr.f32.gmra.mrb[0].mxu0 %v346
  %v543 = vpop.f32.mrb[0].mxu0
  %v544 = vadd.f32 %v462, %v543
  %v545 = vpop.f32.mrb[0].mxu0
  %v546 = vadd.f32 %v466, %v545
  %547 = vdwg.mxu0
  %548 = vmatprep.subr.mxu0 %v446
  %549 = vmatpush1.msra.mxu0 %v445
  %550 = vmatprep.subr.mxu0 %v449
  %551 = vmatpush1.msra.mxu0 %v448
  %552 = vmatprep.subr.mxu0 %v452
  %553 = vmatpush1.msra.mxu0 %v451
  %554 = vmatprep.subr.mxu0 %v455
  %555 = vmatpush1.msra.mxu0 %v454
  %556 = vmatprep.subr.mxu0 0.0
  %557 = vmatpush1.msra.mxu0 0.0
  %558 = vmatprep.subr.mxu0 0.0
  %559 = vmatpush1.msra.mxu0 0.0
  %560 = vmatprep.subr.mxu0 0.0
  %561 = vmatpush1.msra.mxu0 0.0
  %562 = vmatprep.subr.mxu0 0.0
  %563 = vmatpush1.msra.mxu0 0.0
  %564 = vmatprep.subr.mxu0 0.0
  %565 = vmatpush1.msra.mxu0 0.0
  %566 = vmatprep.subr.mxu0 0.0
  %567 = vmatpush1.msra.mxu0 0.0
  %568 = vmatprep.subr.mxu0 0.0
  %569 = vmatpush1.msra.mxu0 0.0
  %570 = vmatprep.subr.mxu0 0.0
  %571 = vmatpush1.msra.mxu0 0.0
  %572 = vmatprep.subr.mxu0 0.0
  %573 = vmatpush1.msra.mxu0 0.0
  %574 = vmatprep.subr.mxu0 0.0
  %575 = vmatpush1.msra.mxu0 0.0
  %576 = vmatprep.subr.mxu0 0.0
  %577 = vmatpush1.msra.mxu0 0.0
  %578 = vmatprep.subr.mxu0 0.0
  %579 = vmatpush1.msra.mxu0 0.0
  %580 = vmatprep.subr.mxu0 0.0
  %581 = vmatpush1.msra.mxu0 0.0
  %582 = vmatprep.subr.mxu0 0.0
  %583 = vmatpush1.msra.mxu0 0.0
  %584 = vmatprep.subr.mxu0 0.0
  %585 = vmatpush1.msra.mxu0 0.0
  %586 = vmatprep.subr.mxu0 0.0
  %587 = vmatpush1.msra.mxu0 0.0
  %588 = vmatprep.subr.mxu0 0.0
  %589 = vmatpush1.msra.mxu0 0.0
  %590 = vmatprep.subr.mxu0 0.0
  %591 = vmatpush1.msra.mxu0 0.0
  %592 = vmatprep.subr.mxu0 0.0
  %593 = vmatpush1.msra.mxu0 0.0
  %594 = vmatprep.subr.mxu0 0.0
  %595 = vmatpush1.msra.mxu0 0.0
  %596 = vmatprep.subr.mxu0 0.0
  %597 = vmatpush1.msra.mxu0 0.0
  %598 = vmatprep.subr.mxu0 0.0
  %599 = vmatpush1.msra.mxu0 0.0
  %600 = vmatprep.subr.mxu0 0.0
  %601 = vmatpush1.msra.mxu0 0.0
  %602 = vmatprep.subr.mxu0 0.0
  %603 = vmatpush1.msra.mxu0 0.0
  %604 = vmatprep.subr.mxu0 0.0
  %605 = vmatpush1.msra.mxu0 0.0
  %606 = vmatprep.subr.mxu0 0.0
  %607 = vmatpush1.msra.mxu0 0.0
  %608 = vmatprep.subr.mxu0 0.0
  %609 = vmatpush1.msra.mxu0 0.0
  %610 = vmatprep.subr.mxu0 0.0
  %611 = vmatpush1.msra.mxu0 0.0
  %612 = vmatprep.mubr.f32.mxu0 0.0
  %613 = vmatmul.mubr.f32.gmra.mrb[0].mxu0 %v475
  %v614 = vpop.f32.mrb[0].mxu0
  %v615 = vadd.f32 %v544, %v614
  %v616 = vpop.f32.mrb[0].mxu0
  %v617 = vadd.f32 %v546, %v616
  %618 = vdwg.mxu0
  %619 = vmatprep.subr.mxu0 0.0
  %620 = vmatpush1.msra.mxu0 %v351
  %621 = vmatprep.subr.mxu0 0.0
  %622 = vmatpush1.msra.mxu0 %v354
  %623 = vmatprep.subr.mxu0 0.0
  %624 = vmatpush1.msra.mxu0 %v357
  %625 = vmatprep.subr.mxu0 0.0
  %626 = vmatpush1.msra.mxu0 %v360
  %627 = vmatprep.subr.mxu0 0.0
  %628 = vmatpush1.msra.mxu0 %v363
  %629 = vmatprep.subr.mxu0 0.0
  %630 = vmatpush1.msra.mxu0 %v366
  %631 = vmatprep.subr.mxu0 0.0
  %632 = vmatpush1.msra.mxu0 %v369
  %633 = vmatprep.subr.mxu0 0.0
  %634 = vmatpush1.msra.mxu0 %v372
  %635 = vmatprep.subr.mxu0 0.0
  %636 = vmatpush1.msra.mxu0 %v375
  %637 = vmatprep.subr.mxu0 0.0
  %638 = vmatpush1.msra.mxu0 %v378
  %639 = vmatprep.subr.mxu0 0.0
  %640 = vmatpush1.msra.mxu0 %v381
  %641 = vmatprep.subr.mxu0 0.0
  %642 = vmatpush1.msra.mxu0 %v384
  %643 = vmatprep.subr.mxu0 0.0
  %644 = vmatpush1.msra.mxu0 %v387
  %645 = vmatprep.subr.mxu0 0.0
  %646 = vmatpush1.msra.mxu0 %v390
  %647 = vmatprep.subr.mxu0 0.0
  %648 = vmatpush1.msra.mxu0 %v393
  %649 = vmatprep.subr.mxu0 0.0
  %650 = vmatpush1.msra.mxu0 %v396
  %651 = vmatprep.subr.mxu0 0.0
  %652 = vmatpush1.msra.mxu0 %v399
  %653 = vmatprep.subr.mxu0 0.0
  %654 = vmatpush1.msra.mxu0 %v402
  %655 = vmatprep.subr.mxu0 0.0
  %656 = vmatpush1.msra.mxu0 %v405
  %657 = vmatprep.subr.mxu0 0.0
  %658 = vmatpush1.msra.mxu0 %v408
  %659 = vmatprep.subr.mxu0 0.0
  %660 = vmatpush1.msra.mxu0 %v411
  %661 = vmatprep.subr.mxu0 0.0
  %662 = vmatpush1.msra.mxu0 %v414
  %663 = vmatprep.subr.mxu0 0.0
  %664 = vmatpush1.msra.mxu0 %v417
  %665 = vmatprep.subr.mxu0 0.0
  %666 = vmatpush1.msra.mxu0 %v420
  %667 = vmatprep.subr.mxu0 0.0
  %668 = vmatpush1.msra.mxu0 %v423
  %669 = vmatprep.subr.mxu0 0.0
  %670 = vmatpush1.msra.mxu0 %v426
  %671 = vmatprep.subr.mxu0 0.0
  %672 = vmatpush1.msra.mxu0 %v429
  %673 = vmatprep.subr.mxu0 0.0
  %674 = vmatpush1.msra.mxu0 %v432
  %675 = vmatprep.subr.mxu0 0.0
  %676 = vmatpush1.msra.mxu0 %v435
  %677 = vmatprep.subr.mxu0 0.0
  %678 = vmatpush1.msra.mxu0 %v438
  %679 = vmatprep.subr.mxu0 0.0
  %680 = vmatpush1.msra.mxu0 %v441
  %681 = vmatprep.subr.mxu0 0.0
  %682 = vmatpush1.msra.mxu0 %v444
  %683 = vmatprep.mubr.f32.mxu0 %v347
  %684 = vmatmul.mubr.f32.gmra.mrb[0].mxu0 %v346
  %v685 = vpop.f32.mrb[0].mxu0
  %v686 = vadd.f32 %v470, %v685
  %v687 = vpop.f32.mrb[0].mxu0
  %688 = vdwg.mxu0
  %689 = vmatprep.subr.mxu0 0.0
  %690 = vmatpush1.msra.mxu0 %v447
  %691 = vmatprep.subr.mxu0 0.0
  %692 = vmatpush1.msra.mxu0 %v450
  %693 = vmatprep.subr.mxu0 0.0
  %694 = vmatpush1.msra.mxu0 %v453
  %695 = vmatprep.subr.mxu0 0.0
  %696 = vmatpush1.msra.mxu0 %v456
  %697 = vmatprep.subr.mxu0 0.0
  %698 = vmatpush1.msra.mxu0 0.0
  %699 = vmatprep.subr.mxu0 0.0
  %700 = vmatpush1.msra.mxu0 0.0
  %701 = vmatprep.subr.mxu0 0.0
  %702 = vmatpush1.msra.mxu0 0.0
  %703 = vmatprep.subr.mxu0 0.0
  %704 = vmatpush1.msra.mxu0 0.0
  %705 = vmatprep.subr.mxu0 0.0
  %706 = vmatpush1.msra.mxu0 0.0
  %707 = vmatprep.subr.mxu0 0.0
  %708 = vmatpush1.msra.mxu0 0.0
  %709 = vmatprep.subr.mxu0 0.0
  %710 = vmatpush1.msra.mxu0 0.0
  %711 = vmatprep.subr.mxu0 0.0
  %712 = vmatpush1.msra.mxu0 0.0
  %713 = vmatprep.subr.mxu0 0.0
  %714 = vmatpush1.msra.mxu0 0.0
  %715 = vmatprep.subr.mxu0 0.0
  %716 = vmatpush1.msra.mxu0 0.0
  %717 = vmatprep.subr.mxu0 0.0
  %718 = vmatpush1.msra.mxu0 0.0
  %719 = vmatprep.subr.mxu0 0.0
  %720 = vmatpush1.msra.mxu0 0.0
  %721 = vmatprep.subr.mxu0 0.0
  %722 = vmatpush1.msra.mxu0 0.0
  %723 = vmatprep.subr.mxu0 0.0
  %724 = vmatpush1.msra.mxu0 0.0
  %725 = vmatprep.subr.mxu0 0.0
  %726 = vmatpush1.msra.mxu0 0.0
  %727 = vmatprep.subr.mxu0 0.0
  %728 = vmatpush1.msra.mxu0 0.0
  %729 = vmatprep.subr.mxu0 0.0
  %730 = vmatpush1.msra.mxu0 0.0
  %731 = vmatprep.subr.mxu0 0.0
  %732 = vmatpush1.msra.mxu0 0.0
  %733 = vmatprep.subr.mxu0 0.0
  %734 = vmatpush1.msra.mxu0 0.0
  %735 = vmatprep.subr.mxu0 0.0
  %736 = vmatpush1.msra.mxu0 0.0
  %737 = vmatprep.subr.mxu0 0.0
  %738 = vmatpush1.msra.mxu0 0.0
  %739 = vmatprep.subr.mxu0 0.0
  %740 = vmatpush1.msra.mxu0 0.0
  %741 = vmatprep.subr.mxu0 0.0
  %742 = vmatpush1.msra.mxu0 0.0
  %743 = vmatprep.subr.mxu0 0.0
  %744 = vmatpush1.msra.mxu0 0.0
  %745 = vmatprep.subr.mxu0 0.0
  %746 = vmatpush1.msra.mxu0 0.0
  %747 = vmatprep.subr.mxu0 0.0
  %748 = vmatpush1.msra.mxu0 0.0
  %749 = vmatprep.subr.mxu0 0.0
  %750 = vmatpush1.msra.mxu0 0.0
  %751 = vmatprep.subr.mxu0 0.0
  %752 = vmatpush1.msra.mxu0 0.0
  %753 = vmatprep.mubr.f32.mxu0 0.0
  %754 = vmatmul.mubr.f32.gmra.mrb[0].mxu0 %v475
  %v755 = vpop.f32.mrb[0].mxu0
  %v756 = vadd.f32 %v686, %v755
  %v757 = vpop.f32.mrb[0].mxu0
  %758 = vdwg.mxu0
  %v759 = vmax.f32 %v615, 0.0
  %v760 = vmax.f32 %v617, 0.0
  %v761 = vmax.f32 %v756, 0.0
  %v762 = vld [vmem:[%s7] sm:$0xff]
  %v763 = vld [vmem:[%s7 + $0x8] sm:$0xff]
  %v764 = vld [vmem:[%s7 + $0x10] sm:$0xff]
  %v765 = vld [vmem:[%s7 + $0x18] sm:$0xff]
  %v766 = vld [vmem:[%s7 + $0x20] sm:$0xff]
  %v767 = vld [vmem:[%s7 + $0x28] sm:$0xff]
  %v768 = vld [vmem:[%s7 + $0x30] sm:$0xff]
  %v769 = vld [vmem:[%s7 + $0x38] sm:$0xff]
  %v770 = vld [vmem:[%s7 + $0x40] sm:$0xff]
  %v771 = vld [vmem:[%s7 + $0x48] sm:$0xff]
  %v772 = vld [vmem:[%s7 + $0x50] sm:$0xff]
  %v773 = vld [vmem:[%s7 + $0x58] sm:$0xff]
  %v774 = vld [vmem:[%s7 + $0x60] sm:$0xff]
  %v775 = vld [vmem:[%s7 + $0x68] sm:$0xff]
  %v776 = vld [vmem:[%s7 + $0x70] sm:$0xff]
  %v777 = vld [vmem:[%s7 + $0x78] sm:$0xff]
  %v778 = vld [vmem:[%s7 + $0x80] sm:$0xff]
  %v779 = vld [vmem:[%s7 + $0x88] sm:$0xff]
  %v780 = vld [vmem:[%s7 + $0x90] sm:$0xff]
  %v781 = vld [vmem:[%s7 + $0x98] sm:$0xff]
  %v782 = vld [vmem:[%s7 + $0xa0] sm:$0xff]
  %v783 = vld [vmem:[%s7 + $0xa8] sm:$0xff]
  %v784 = vld [vmem:[%s7 + $0xb0] sm:$0xff]
  %v785 = vld [vmem:[%s7 + $0xb8] sm:$0xff]
  %v786 = vld [vmem:[%s7 + $0xc0] sm:$0xff]
  %v787 = vld [vmem:[%s7 + $0xc8] sm:$0xff]
  %v788 = vld [vmem:[%s7 + $0xd0] sm:$0xff]
  %v789 = vld [vmem:[%s7 + $0xd8] sm:$0xff]
  %v790 = vld [vmem:[%s7 + $0xe0] sm:$0xff]
  %v791 = vld [vmem:[%s7 + $0xe8] sm:$0xff]
  %v792 = vld [vmem:[%s7 + $0xf0] sm:$0xff]
  %v793 = vld [vmem:[%s7 + $0xf8] sm:$0xff]
  %v794 = vld [vmem:[%s7 + $0x100] sm:$0xff]
  %v795 = vld [vmem:[%s7 + $0x108] sm:$0xff]
  %v796 = vld [vmem:[%s7 + $0x110] sm:$0xff]
  %v797 = vld [vmem:[%s8] sm:$0x1]
  %v799 = vlaneseq
  %v800 = vshrl.u32 %v799, 7
  %v801 = vsub.s32 0, %v800
  %v802 = vrot.slane %v797, %v801
  %vm804 = vcmask 195584
  %v806 = vsel %vm804, %v761, 0
  %808 = vmatprep.subr.mxu0 0.0
  %809 = vmatpush1.msra.mxu0 %v762
  %810 = vmatprep.subr.mxu0 0.0
  %811 = vmatpush1.msra.mxu0 %v763
  %812 = vmatprep.subr.mxu0 0.0
  %813 = vmatpush1.msra.mxu0 %v764
  %814 = vmatprep.subr.mxu0 0.0
  %815 = vmatpush1.msra.mxu0 %v765
  %816 = vmatprep.subr.mxu0 0.0
  %817 = vmatpush1.msra.mxu0 %v766
  %818 = vmatprep.subr.mxu0 0.0
  %819 = vmatpush1.msra.mxu0 %v767
  %820 = vmatprep.subr.mxu0 0.0
  %821 = vmatpush1.msra.mxu0 %v768
  %822 = vmatprep.subr.mxu0 0.0
  %823 = vmatpush1.msra.mxu0 %v769
  %824 = vmatprep.subr.mxu0 0.0
  %825 = vmatpush1.msra.mxu0 %v770
  %826 = vmatprep.subr.mxu0 0.0
  %827 = vmatpush1.msra.mxu0 %v771
  %828 = vmatprep.subr.mxu0 0.0
  %829 = vmatpush1.msra.mxu0 %v772
  %830 = vmatprep.subr.mxu0 0.0
  %831 = vmatpush1.msra.mxu0 %v773
  %832 = vmatprep.subr.mxu0 0.0
  %833 = vmatpush1.msra.mxu0 %v774
  %834 = vmatprep.subr.mxu0 0.0
  %835 = vmatpush1.msra.mxu0 %v775
  %836 = vmatprep.subr.mxu0 0.0
  %837 = vmatpush1.msra.mxu0 %v776
  %838 = vmatprep.subr.mxu0 0.0
  %839 = vmatpush1.msra.mxu0 %v777
  %840 = vmatprep.subr.mxu0 0.0
  %841 = vmatpush1.msra.mxu0 %v778
  %842 = vmatprep.subr.mxu0 0.0
  %843 = vmatpush1.msra.mxu0 %v779
  %844 = vmatprep.subr.mxu0 0.0
  %845 = vmatpush1.msra.mxu0 %v780
  %846 = vmatprep.subr.mxu0 0.0
  %847 = vmatpush1.msra.mxu0 %v781
  %848 = vmatprep.subr.mxu0 0.0
  %849 = vmatpush1.msra.mxu0 %v782
  %850 = vmatprep.subr.mxu0 0.0
  %851 = vmatpush1.msra.mxu0 %v783
  %852 = vmatprep.subr.mxu0 0.0
  %853 = vmatpush1.msra.mxu0 %v784
  %854 = vmatprep.subr.mxu0 0.0
  %855 = vmatpush1.msra.mxu0 %v785
  %856 = vmatprep.subr.mxu0 0.0
  %857 = vmatpush1.msra.mxu0 %v786
  %858 = vmatprep.subr.mxu0 0.0
  %859 = vmatpush1.msra.mxu0 %v787
  %860 = vmatprep.subr.mxu0 0.0
  %861 = vmatpush1.msra.mxu0 %v788
  %862 = vmatprep.subr.mxu0 0.0
  %863 = vmatpush1.msra.mxu0 %v789
  %864 = vmatprep.subr.mxu0 0.0
  %865 = vmatpush1.msra.mxu0 %v790
  %866 = vmatprep.subr.mxu0 0.0
  %867 = vmatpush1.msra.mxu0 %v791
  %868 = vmatprep.subr.mxu0 0.0
  %869 = vmatpush1.msra.mxu0 %v792
  %870 = vmatprep.subr.mxu0 0.0
  %871 = vmatpush1.msra.mxu0 %v793
  %872 = vmatprep.mubr.f32.mxu0 %v760
  %873 = vmatmul.mubr.f32.gmra.mrb[0].mxu0 %v759
  %v874 = vpop.f32.mrb[0].mxu0
  %v875 = vadd.f32 %v802, %v874
  %v876 = vpop.f32.mrb[0].mxu0
  %877 = vdwg.mxu0
  %878 = vmatprep.subr.mxu0 0.0
  %879 = vmatpush1.msra.mxu0 %v794
  %880 = vmatprep.subr.mxu0 0.0
  %881 = vmatpush1.msra.mxu0 %v795
  %882 = vmatprep.subr.mxu0 0.0
  %883 = vmatpush1.msra.mxu0 %v796
  %884 = vmatprep.subr.mxu0 0.0
  %885 = vmatpush1.msra.mxu0 0.0
  %886 = vmatprep.subr.mxu0 0.0
  %887 = vmatpush1.msra.mxu0 0.0
  %888 = vmatprep.subr.mxu0 0.0
  %889 = vmatpush1.msra.mxu0 0.0
  %890 = vmatprep.subr.mxu0 0.0
  %891 = vmatpush1.msra.mxu0 0.0
  %892 = vmatprep.subr.mxu0 0.0
  %893 = vmatpush1.msra.mxu0 0.0
  %894 = vmatprep.subr.mxu0 0.0
  %895 = vmatpush1.msra.mxu0 0.0
  %896 = vmatprep.subr.mxu0 0.0
  %897 = vmatpush1.msra.mxu0 0.0
  %898 = vmatprep.subr.mxu0 0.0
  %899 = vmatpush1.msra.mxu0 0.0
  %900 = vmatprep.subr.mxu0 0.0
  %901 = vmatpush1.msra.mxu0 0.0
  %902 = vmatprep.subr.mxu0 0.0
  %903 = vmatpush1.msra.mxu0 0.0
  %904 = vmatprep.subr.mxu0 0.0
  %905 = vmatpush1.msra.mxu0 0.0
  %906 = vmatprep.subr.mxu0 0.0
  %907 = vmatpush1.msra.mxu0 0.0
  %908 = vmatprep.subr.mxu0 0.0
  %909 = vmatpush1.msra.mxu0 0.0
  %910 = vmatprep.subr.mxu0 0.0
  %911 = vmatpush1.msra.mxu0 0.0
  %912 = vmatprep.subr.mxu0 0.0
  %913 = vmatpush1.msra.mxu0 0.0
  %914 = vmatprep.subr.mxu0 0.0
  %915 = vmatpush1.msra.mxu0 0.0
  %916 = vmatprep.subr.mxu0 0.0
  %917 = vmatpush1.msra.mxu0 0.0
  %918 = vmatprep.subr.mxu0 0.0
  %919 = vmatpush1.msra.mxu0 0.0
  %920 = vmatprep.subr.mxu0 0.0
  %921 = vmatpush1.msra.mxu0 0.0
  %922 = vmatprep.subr.mxu0 0.0
  %923 = vmatpush1.msra.mxu0 0.0
  %924 = vmatprep.subr.mxu0 0.0
  %925 = vmatpush1.msra.mxu0 0.0
  %926 = vmatprep.subr.mxu0 0.0
  %927 = vmatpush1.msra.mxu0 0.0
  %928 = vmatprep.subr.mxu0 0.0
  %929 = vmatpush1.msra.mxu0 0.0
  %930 = vmatprep.subr.mxu0 0.0
  %931 = vmatpush1.msra.mxu0 0.0
  %932 = vmatprep.subr.mxu0 0.0
  %933 = vmatpush1.msra.mxu0 0.0
  %934 = vmatprep.subr.mxu0 0.0
  %935 = vmatpush1.msra.mxu0 0.0
  %936 = vmatprep.subr.mxu0 0.0
  %937 = vmatpush1.msra.mxu0 0.0
  %938 = vmatprep.subr.mxu0 0.0
  %939 = vmatpush1.msra.mxu0 0.0
  %940 = vmatprep.subr.mxu0 0.0
  %941 = vmatpush1.msra.mxu0 0.0
  %942 = vmatprep.mubr.f32.mxu0 0.0
  %943 = vmatmul.mubr.f32.gmra.mrb[0].mxu0 %v806
  %v944 = vpop.f32.mrb[0].mxu0
  %v945 = vadd.f32 %v875, %v944
  %v946 = vpop.f32.mrb[0].mxu0
  %947 = vdwg.mxu0
  %v948 = vmax.f32 %v945, 0.0
  %vm949 = vcmask 910336
  %950 = vst.msk [vmem:[%s9] sm:$0x3] %vm949, %v948
  // Predicated region
  $region38: #{decoder_forward.1} parent=0 // pred_check
    _
  $region39: #{decoder_forward.1} parent=0 // pred_check_branch
    %952 = sbr.rel (0) target = $region41
  $region40: #{decoder_forward.1} parent=0 // pred_region
    _
  $region41: #{decoder_forward.1} parent=0 // pred_fallthru
    _
  // Predicated region
  $region42: #{decoder_forward.1} parent=0 // pred_check
    _
  $region43: #{decoder_forward.1} parent=0 // pred_check_branch
    %954 = sbr.rel (0) target = $region45
  $region44: #{decoder_forward.1} parent=0 // pred_region
    _
  $region45: #{decoder_forward.1} parent=0 // pred_fallthru
    _

</llo_original>
